<compile_context>
chip_gen: v7x
topology: tpu7x:2x2x1
jax: 0.10.0
libtpu: 0.0.40
codegen_flags: <defaults>
</compile_context>

<pallas_src>
import functools

import jax
import jax.numpy as jnp
from jax.experimental import pallas as pl
from jax.experimental.pallas import tpu as pltpu


def _kaln_net_kernel(*refs, dims, degree):
    """Fused forward over all KALN layers.

    refs = (x_ref, [w_fused, gamma, beta] * n_layers, o_ref), all VMEM-resident.
    dims = tuple of (in_f, out_f) per layer (static Python ints).
    w_fused rows are [base | P_0 | P_1 | ... | P_degree] blocks of in_f rows each,
    packed densely (in_f is a multiple of the bf16 sublane pack here, so the static
    row slices below are aligned zero-cost views).
    """
    x_ref = refs[0]
    o_ref = refs[-1]
    w_refs = refs[1:-1]

    h = x_ref[...]                                   # (B, in_f0) f32

    for li, (in_f, out_f) in enumerate(dims):
        w_ref, g_ref, b_ref = w_refs[3 * li:3 * li + 3]
        x = h

        def wblk(d, _w=w_ref, _in=in_f):
            # row block d of the fused weight: 0 = base weight, 1.. = Legendre degree d-1
            return _w[d * _in:(d + 1) * _in, :]      # static slice

        # --- base branch feeds the shared f32 accumulator (bf16 MXU, f32 acc) --------
        silu_x = x * jax.nn.sigmoid(x)
        acc = jnp.dot(silu_x.astype(jnp.bfloat16), wblk(0),
                      preferred_element_type=jnp.float32)          # (B, out_f) f32

        # --- normalize input to [-1, 1] with the GLOBAL min/max (reference semantics)
        x_min = jnp.min(x)
        x_max = jnp.max(x)
        # scalar reciprocal-style rewrite: one mul + one add per element, no tensor divide
        scale = 2.0 / (x_max - x_min)        # same div-by-zero hazard as the reference
        shift = -x_min * scale - 1.0
        xn = x * scale + shift

        # --- Legendre recurrence; each P_d is dotted into acc as soon as it exists ---
        p_prev = jnp.ones_like(xn)                                   # P_0
        acc += jnp.dot(p_prev.astype(jnp.bfloat16), wblk(1),
                       preferred_element_type=jnp.float32)
        if degree >= 1:
            p_cur = xn                                               # P_1
            acc += jnp.dot(p_cur.astype(jnp.bfloat16), wblk(2),
                           preferred_element_type=jnp.float32)
            for n in range(1, degree):
                c1 = (2.0 * n + 1.0) / (n + 1.0)    # static constants (no divides)
                c2 = n / (n + 1.0)
                p_next = c1 * xn * p_cur - c2 * p_prev               # P_{n+1}
                acc += jnp.dot(p_next.astype(jnp.bfloat16), wblk(n + 2),
                               preferred_element_type=jnp.float32)
                p_prev, p_cur = p_cur, p_next

        # --- LayerNorm(out_features) + SiLU (f32) -------------------------------------
        inv_n = 1.0 / out_f
        mean = jnp.sum(acc, axis=-1, keepdims=True) * inv_n
        e2 = jnp.sum(acc * acc, axis=-1, keepdims=True) * inv_n
        var = e2 - mean * mean                     # E[y^2] - E[y]^2 (independent reductions)
        inv_std = jax.lax.rsqrt(var + 1e-5)
        sc = g_ref[...] * inv_std                  # gamma folded into the rsqrt scale
        sh = b_ref[...] - mean * sc
        y = acc * sc + sh
        h = y * jax.nn.sigmoid(y)                  # SiLU

    o_ref[...] = h.astype(o_ref.dtype)


def init_kaln_params(key, layers_hidden, degree):
    """Deterministic kaiming_uniform-style init (gain=1 => bound = sqrt(3/fan_in)).

    torch.nn layout: base_w (out, in); poly_w (out, in*(degree+1)) with FEATURE-major
    columns (column index = feat*(degree+1) + d, i.e. torch.stack(polys, -1).view(B, -1));
    LayerNorm gamma/beta of shape (1, out).
    """
    params = []
    for in_f, out_f in zip(layers_hidden[:-1], layers_hidden[1:]):
        key, k1, k2 = jax.random.split(key, 3)
        b_bound = (3.0 / in_f) ** 0.5
        p_bound = (3.0 / (in_f * (degree + 1))) ** 0.5
        base_w = jax.random.uniform(k1, (out_f, in_f), jnp.float32, -b_bound, b_bound)
        poly_w = jax.random.uniform(k2, (out_f, in_f * (degree + 1)), jnp.float32,
                                    -p_bound, p_bound)
        gamma = jnp.ones((1, out_f), jnp.float32)     # LayerNorm weight
        beta = jnp.zeros((1, out_f), jnp.float32)     # LayerNorm bias
        params.append((base_w, poly_w, gamma, beta))
    return params


def prepare_kaln_params(params, layers_hidden, degree):
    """One-time weight glue (at init, NOT per forward call).

    Builds, per layer, ONE fused bf16 weight of shape ((degree+2)*in_f, out_f):
    row blocks are [base | P_0 | ... | P_degree], each in_f rows, packed DENSELY
    (no 128-lane padding of each block -> minimal K, minimal bytes). poly_w columns
    are interpreted FEATURE-major (PyTorch stack(..., -1).view layout) and reordered
    to degree-major row blocks here, so trained PyTorch weights port correctly.
    """
    prepared = []
    for (base_w, poly_w, gamma, beta), in_f, out_f in zip(
            params, layers_hidden[:-1], layers_hidden[1:]):
        # (out, in*(d+1)) -> (in*(d+1), out) -> (in, d+1, out) -> (d+1, in, out)
        pw = poly_w.T.reshape(in_f, degree + 1, out_f).transpose(1, 0, 2)
        w_fused = jnp.concatenate([base_w.T[None, :, :], pw], axis=0)   # (d+2, in, out)
        w_fused = w_fused.reshape((degree + 2) * in_f, out_f).astype(jnp.bfloat16)
        prepared.append((w_fused, gamma.astype(jnp.float32), beta.astype(jnp.float32)))
    return prepared


def kaln_forward(x, prepared_params, layers_hidden, degree):
    """Whole-network forward in a single pallas_call (activations never leave VMEM).

    No batch grid: the reference normalizes with a GLOBAL min/max over the whole
    (batch, in_f) activation, so batch tiles are not independent; everything fits
    trivially in VMEM at these sizes. Larger batches amortize the fixed ~us call cost.
    """
    batch, in_f0 = x.shape
    assert in_f0 == layers_hidden[0]
    dims = tuple(zip(layers_hidden[:-1], layers_hidden[1:]))
    out_f_last = layers_hidden[-1]

    flat_w = [w for layer in prepared_params for w in layer]

    # Advisory cost estimate so XLA can schedule/overlap around the custom call.
    flops = 0
    transcendentals = 0
    for in_f, out_f in dims:
        flops += 2 * batch * (degree + 2) * in_f * out_f        # fused MXU accumulation
        flops += batch * (8 * in_f + 8 * out_f)                 # recurrence / SiLU / LN (approx)
        transcendentals += batch * (in_f + out_f)               # sigmoid exps
    bytes_accessed = int(x.size * x.dtype.itemsize
                         + sum(int(w.size) * w.dtype.itemsize for w in flat_w)
                         + batch * out_f_last * 4)

    # Actual VMEM footprint (operands + activation temps) with generous headroom; the
    # scoped defaults (16 MiB v5e / 32 MiB v6e,v7x) are plenty here but medium configs
    # would silently hit them, so be explicit.
    temp_bytes = sum(batch * ((degree + 6) * in_f + 6 * out_f) * 4 for in_f, out_f in dims)
    vmem_limit = min(int(2 * bytes_accessed + 2 * temp_bytes) + (4 << 20), 100 << 20)

    kernel = functools.partial(_kaln_net_kernel, dims=dims, degree=degree)
    return pl.pallas_call(
        kernel,
        out_shape=jax.ShapeDtypeStruct((batch, out_f_last), jnp.float32),
        in_specs=[pl.BlockSpec(memory_space=pltpu.MemorySpace.VMEM)] * (1 + len(flat_w)),
        out_specs=pl.BlockSpec(memory_space=pltpu.MemorySpace.VMEM),
        compiler_params=pltpu.CompilerParams(vmem_limit_bytes=vmem_limit),
        cost_estimate=pl.CostEstimate(flops=int(flops),
                                      transcendentals=int(transcendentals),
                                      bytes_accessed=bytes_accessed),
    )(x, *flat_w)


if __name__ == "__main__":
    layers_hidden = [32, 64, 16]
    degree = 3
    batch = 8   # kernel handles any B; larger B amortizes the fixed call overhead

    key = jax.random.PRNGKey(0)
    key, xk = jax.random.split(key)
    x = jax.random.normal(xk, (batch, layers_hidden[0]), dtype=jnp.float32)

    params = init_kaln_params(key, layers_hidden, degree)
    prepared = prepare_kaln_params(params, layers_hidden, degree)   # one-time weight prep

    fwd = jax.jit(functools.partial(kaln_forward,
                                    layers_hidden=layers_hidden, degree=degree))
    out = fwd(x, prepared)
    jax.block_until_ready(out)

    assert out.shape == (batch, layers_hidden[-1]) and out.dtype == jnp.float32
    assert bool(jnp.all(jnp.isfinite(out)))
    print("KERNEL_OK")
</pallas_src>

<mosaic_0001>
module attributes {stable_mosaic.version = 11 : i64} {
  func.func @_kaln_net_kernel(%arg0: memref<8x32xf32, #tpu.memory_space<vmem>>, %arg1: memref<160x64xbf16, #tpu.memory_space<vmem>>, %arg2: memref<1x64xf32, #tpu.memory_space<vmem>>, %arg3: memref<1x64xf32, #tpu.memory_space<vmem>>, %arg4: memref<320x16xbf16, #tpu.memory_space<vmem>>, %arg5: memref<1x16xf32, #tpu.memory_space<vmem>>, %arg6: memref<1x16xf32, #tpu.memory_space<vmem>>, %arg7: memref<8x16xf32, #tpu.memory_space<vmem>>) attributes {dimension_semantics = [], scalar_prefetch = 0 : i64, scratch_operands = 0 : i64, tpu.core_type = #tpu.core_type<tc>} {
    %c0 = arith.constant 0 : index
    %c0_0 = arith.constant 0 : index
    %0 = vector.load %arg0[%c0, %c0_0] : memref<8x32xf32, #tpu.memory_space<vmem>>, vector<8x32xf32>
    %1 = arith.negf %0 : vector<8x32xf32>
    %2 = math.exp %1 : vector<8x32xf32>
    %cst = arith.constant 1.000000e+00 : f32
    %3 = vector.broadcast %cst : f32 to vector<8x32xf32>
    %4 = arith.addf %3, %2 : vector<8x32xf32>
    %5 = arith.divf %3, %4 : vector<8x32xf32>
    %6 = arith.mulf %0, %5 : vector<8x32xf32>
    %7 = arith.truncf %6 : vector<8x32xf32> to vector<8x32xbf16>
    %c0_1 = arith.constant 0 : index
    %c0_2 = arith.constant 0 : index
    %8 = vector.load %arg1[%c0_1, %c0_2] : memref<160x64xbf16, #tpu.memory_space<vmem>>, vector<32x64xbf16>
    %cst_3 = arith.constant dense<0.000000e+00> : vector<8x64xf32>
    %9 = tpu.matmul %7, %8, %cst_3 {dimension_numbers = #tpu.dot_dimension_numbers<[1], [0], [0], [1], [0, 0, 1, 1], [], []>} : vector<8x32xbf16>, vector<32x64xbf16>, vector<8x64xf32> -> vector<8x64xf32>
    %10 = vector.shape_cast %0 : vector<8x32xf32> to vector<1x8x32xf32>
    %cst_4 = arith.constant dense<0x7F800000> : vector<1xf32>
    %11 = vector.multi_reduction <minimumf>, %10, %cst_4 [1, 2] : vector<1x8x32xf32> to vector<1xf32>
    %12 = vector.shape_cast %11 : vector<1xf32> to vector<1x1x1xf32>
    %13 = vector.extract %12[0, 0, 0] : f32 from vector<1x1x1xf32>
    %14 = vector.shape_cast %0 : vector<8x32xf32> to vector<1x8x32xf32>
    %cst_5 = arith.constant dense<0xFF800000> : vector<1xf32>
    %15 = vector.multi_reduction <maximumf>, %14, %cst_5 [1, 2] : vector<1x8x32xf32> to vector<1xf32>
    %16 = vector.shape_cast %15 : vector<1xf32> to vector<1x1x1xf32>
    %17 = vector.extract %16[0, 0, 0] : f32 from vector<1x1x1xf32>
    %18 = arith.subf %17, %13 : f32
    %cst_6 = arith.constant 2.000000e+00 : f32
    %19 = arith.divf %cst_6, %18 : f32
    %cst_7 = arith.constant 0.000000e+00 : f32
    %20 = arith.subf %cst_7, %13 : f32
    %21 = arith.mulf %20, %19 : f32
    %cst_8 = arith.constant 1.000000e+00 : f32
    %22 = arith.subf %21, %cst_8 : f32
    %23 = vector.broadcast %19 : f32 to vector<8x32xf32>
    %24 = arith.mulf %0, %23 : vector<8x32xf32>
    %25 = vector.broadcast %22 : f32 to vector<8x32xf32>
    %26 = arith.addf %24, %25 : vector<8x32xf32>
    %cst_9 = arith.constant 1.000000e+00 : f32
    %27 = vector.broadcast %cst_9 : f32 to vector<8x32xf32>
    %28 = arith.truncf %27 : vector<8x32xf32> to vector<8x32xbf16>
    %c32 = arith.constant 32 : index
    %c0_10 = arith.constant 0 : index
    %29 = vector.load %arg1[%c32, %c0_10] : memref<160x64xbf16, #tpu.memory_space<vmem>>, vector<32x64xbf16>
    %cst_11 = arith.constant dense<0.000000e+00> : vector<8x64xf32>
    %30 = tpu.matmul %28, %29, %cst_11 {dimension_numbers = #tpu.dot_dimension_numbers<[1], [0], [0], [1], [0, 0, 1, 1], [], []>} : vector<8x32xbf16>, vector<32x64xbf16>, vector<8x64xf32> -> vector<8x64xf32>
    %31 = arith.addf %9, %30 : vector<8x64xf32>
    %32 = arith.truncf %26 : vector<8x32xf32> to vector<8x32xbf16>
    %c64 = arith.constant 64 : index
    %c0_12 = arith.constant 0 : index
    %33 = vector.load %arg1[%c64, %c0_12] : memref<160x64xbf16, #tpu.memory_space<vmem>>, vector<32x64xbf16>
    %cst_13 = arith.constant dense<0.000000e+00> : vector<8x64xf32>
    %34 = tpu.matmul %32, %33, %cst_13 {dimension_numbers = #tpu.dot_dimension_numbers<[1], [0], [0], [1], [0, 0, 1, 1], [], []>} : vector<8x32xbf16>, vector<32x64xbf16>, vector<8x64xf32> -> vector<8x64xf32>
    %35 = arith.addf %31, %34 : vector<8x64xf32>
    %cst_14 = arith.constant 1.500000e+00 : f32
    %36 = vector.broadcast %cst_14 : f32 to vector<8x32xf32>
    %37 = arith.mulf %36, %26 : vector<8x32xf32>
    %38 = arith.mulf %37, %26 : vector<8x32xf32>
    %cst_15 = arith.constant 5.000000e-01 : f32
    %39 = vector.broadcast %cst_15 : f32 to vector<8x32xf32>
    %40 = arith.mulf %39, %27 : vector<8x32xf32>
    %41 = arith.subf %38, %40 : vector<8x32xf32>
    %42 = arith.truncf %41 : vector<8x32xf32> to vector<8x32xbf16>
    %c96 = arith.constant 96 : index
    %c0_16 = arith.constant 0 : index
    %43 = vector.load %arg1[%c96, %c0_16] : memref<160x64xbf16, #tpu.memory_space<vmem>>, vector<32x64xbf16>
    %cst_17 = arith.constant dense<0.000000e+00> : vector<8x64xf32>
    %44 = tpu.matmul %42, %43, %cst_17 {dimension_numbers = #tpu.dot_dimension_numbers<[1], [0], [0], [1], [0, 0, 1, 1], [], []>} : vector<8x32xbf16>, vector<32x64xbf16>, vector<8x64xf32> -> vector<8x64xf32>
    %45 = arith.addf %35, %44 : vector<8x64xf32>
    %cst_18 = arith.constant 1.66666663 : f32
    %46 = vector.broadcast %cst_18 : f32 to vector<8x32xf32>
    %47 = arith.mulf %46, %26 : vector<8x32xf32>
    %48 = arith.mulf %47, %41 : vector<8x32xf32>
    %cst_19 = arith.constant 0.666666686 : f32
    %49 = vector.broadcast %cst_19 : f32 to vector<8x32xf32>
    %50 = arith.mulf %49, %26 : vector<8x32xf32>
    %51 = arith.subf %48, %50 : vector<8x32xf32>
    %52 = arith.truncf %51 : vector<8x32xf32> to vector<8x32xbf16>
    %c128 = arith.constant 128 : index
    %c0_20 = arith.constant 0 : index
    %53 = vector.load %arg1[%c128, %c0_20] : memref<160x64xbf16, #tpu.memory_space<vmem>>, vector<32x64xbf16>
    %cst_21 = arith.constant dense<0.000000e+00> : vector<8x64xf32>
    %54 = tpu.matmul %52, %53, %cst_21 {dimension_numbers = #tpu.dot_dimension_numbers<[1], [0], [0], [1], [0, 0, 1, 1], [], []>} : vector<8x32xbf16>, vector<32x64xbf16>, vector<8x64xf32> -> vector<8x64xf32>
    %55 = arith.addf %45, %54 : vector<8x64xf32>
    %cst_22 = arith.constant dense<0.000000e+00> : vector<8xf32>
    %56 = vector.multi_reduction <add>, %55, %cst_22 [1] : vector<8x64xf32> to vector<8xf32>
    %57 = vector.shape_cast %56 : vector<8xf32> to vector<8x1xf32>
    %cst_23 = arith.constant 1.562500e-02 : f32
    %58 = vector.broadcast %cst_23 : f32 to vector<8x1xf32>
    %59 = arith.mulf %57, %58 : vector<8x1xf32>
    %60 = arith.mulf %55, %55 : vector<8x64xf32>
    %cst_24 = arith.constant dense<0.000000e+00> : vector<8xf32>
    %61 = vector.multi_reduction <add>, %60, %cst_24 [1] : vector<8x64xf32> to vector<8xf32>
    %62 = vector.shape_cast %61 : vector<8xf32> to vector<8x1xf32>
    %cst_25 = arith.constant 1.562500e-02 : f32
    %63 = vector.broadcast %cst_25 : f32 to vector<8x1xf32>
    %64 = arith.mulf %62, %63 : vector<8x1xf32>
    %65 = arith.mulf %59, %59 : vector<8x1xf32>
    %66 = arith.subf %64, %65 : vector<8x1xf32>
    %cst_26 = arith.constant 9.99999974E-6 : f32
    %67 = vector.broadcast %cst_26 : f32 to vector<8x1xf32>
    %68 = arith.addf %66, %67 : vector<8x1xf32>
    %69 = math.rsqrt %68 : vector<8x1xf32>
    %c0_27 = arith.constant 0 : index
    %c0_28 = arith.constant 0 : index
    %70 = vector.load %arg2[%c0_27, %c0_28] : memref<1x64xf32, #tpu.memory_space<vmem>>, vector<1x64xf32>
    %71 = vector.broadcast %70 : vector<1x64xf32> to vector<8x64xf32>
    %72 = vector.broadcast %69 : vector<8x1xf32> to vector<8x64xf32>
    %73 = arith.mulf %71, %72 : vector<8x64xf32>
    %c0_29 = arith.constant 0 : index
    %c0_30 = arith.constant 0 : index
    %74 = vector.load %arg3[%c0_29, %c0_30] : memref<1x64xf32, #tpu.memory_space<vmem>>, vector<1x64xf32>
    %75 = vector.broadcast %59 : vector<8x1xf32> to vector<8x64xf32>
    %76 = arith.mulf %75, %73 : vector<8x64xf32>
    %77 = vector.broadcast %74 : vector<1x64xf32> to vector<8x64xf32>
    %78 = arith.subf %77, %76 : vector<8x64xf32>
    %79 = arith.mulf %55, %73 : vector<8x64xf32>
    %80 = arith.addf %79, %78 : vector<8x64xf32>
    %81 = arith.negf %80 : vector<8x64xf32>
    %82 = math.exp %81 : vector<8x64xf32>
    %cst_31 = arith.constant 1.000000e+00 : f32
    %83 = vector.broadcast %cst_31 : f32 to vector<8x64xf32>
    %84 = arith.addf %83, %82 : vector<8x64xf32>
    %85 = arith.divf %83, %84 : vector<8x64xf32>
    %86 = arith.mulf %80, %85 : vector<8x64xf32>
    %87 = arith.negf %86 : vector<8x64xf32>
    %88 = math.exp %87 : vector<8x64xf32>
    %cst_32 = arith.constant 1.000000e+00 : f32
    %89 = vector.broadcast %cst_32 : f32 to vector<8x64xf32>
    %90 = arith.addf %89, %88 : vector<8x64xf32>
    %91 = arith.divf %89, %90 : vector<8x64xf32>
    %92 = arith.mulf %86, %91 : vector<8x64xf32>
    %93 = arith.truncf %92 : vector<8x64xf32> to vector<8x64xbf16>
    %c0_33 = arith.constant 0 : index
    %c0_34 = arith.constant 0 : index
    %94 = vector.load %arg4[%c0_33, %c0_34] : memref<320x16xbf16, #tpu.memory_space<vmem>>, vector<64x16xbf16>
    %cst_35 = arith.constant dense<0.000000e+00> : vector<8x16xf32>
    %95 = tpu.matmul %93, %94, %cst_35 {dimension_numbers = #tpu.dot_dimension_numbers<[1], [0], [0], [1], [0, 0, 1, 1], [], []>} : vector<8x64xbf16>, vector<64x16xbf16>, vector<8x16xf32> -> vector<8x16xf32>
    %96 = vector.shape_cast %86 : vector<8x64xf32> to vector<1x8x64xf32>
    %cst_36 = arith.constant dense<0x7F800000> : vector<1xf32>
    %97 = vector.multi_reduction <minimumf>, %96, %cst_36 [1, 2] : vector<1x8x64xf32> to vector<1xf32>
    %98 = vector.shape_cast %97 : vector<1xf32> to vector<1x1x1xf32>
    %99 = vector.extract %98[0, 0, 0] : f32 from vector<1x1x1xf32>
    %100 = vector.shape_cast %86 : vector<8x64xf32> to vector<1x8x64xf32>
    %cst_37 = arith.constant dense<0xFF800000> : vector<1xf32>
    %101 = vector.multi_reduction <maximumf>, %100, %cst_37 [1, 2] : vector<1x8x64xf32> to vector<1xf32>
    %102 = vector.shape_cast %101 : vector<1xf32> to vector<1x1x1xf32>
    %103 = vector.extract %102[0, 0, 0] : f32 from vector<1x1x1xf32>
    %104 = arith.subf %103, %99 : f32
    %cst_38 = arith.constant 2.000000e+00 : f32
    %105 = arith.divf %cst_38, %104 : f32
    %cst_39 = arith.constant 0.000000e+00 : f32
    %106 = arith.subf %cst_39, %99 : f32
    %107 = arith.mulf %106, %105 : f32
    %cst_40 = arith.constant 1.000000e+00 : f32
    %108 = arith.subf %107, %cst_40 : f32
    %109 = vector.broadcast %105 : f32 to vector<8x64xf32>
    %110 = arith.mulf %86, %109 : vector<8x64xf32>
    %111 = vector.broadcast %108 : f32 to vector<8x64xf32>
    %112 = arith.addf %110, %111 : vector<8x64xf32>
    %cst_41 = arith.constant 1.000000e+00 : f32
    %113 = vector.broadcast %cst_41 : f32 to vector<8x64xf32>
    %114 = arith.truncf %113 : vector<8x64xf32> to vector<8x64xbf16>
    %c64_42 = arith.constant 64 : index
    %c0_43 = arith.constant 0 : index
    %115 = vector.load %arg4[%c64_42, %c0_43] : memref<320x16xbf16, #tpu.memory_space<vmem>>, vector<64x16xbf16>
    %cst_44 = arith.constant dense<0.000000e+00> : vector<8x16xf32>
    %116 = tpu.matmul %114, %115, %cst_44 {dimension_numbers = #tpu.dot_dimension_numbers<[1], [0], [0], [1], [0, 0, 1, 1], [], []>} : vector<8x64xbf16>, vector<64x16xbf16>, vector<8x16xf32> -> vector<8x16xf32>
    %117 = arith.addf %95, %116 : vector<8x16xf32>
    %118 = arith.truncf %112 : vector<8x64xf32> to vector<8x64xbf16>
    %c128_45 = arith.constant 128 : index
    %c0_46 = arith.constant 0 : index
    %119 = vector.load %arg4[%c128_45, %c0_46] : memref<320x16xbf16, #tpu.memory_space<vmem>>, vector<64x16xbf16>
    %cst_47 = arith.constant dense<0.000000e+00> : vector<8x16xf32>
    %120 = tpu.matmul %118, %119, %cst_47 {dimension_numbers = #tpu.dot_dimension_numbers<[1], [0], [0], [1], [0, 0, 1, 1], [], []>} : vector<8x64xbf16>, vector<64x16xbf16>, vector<8x16xf32> -> vector<8x16xf32>
    %121 = arith.addf %117, %120 : vector<8x16xf32>
    %cst_48 = arith.constant 1.500000e+00 : f32
    %122 = vector.broadcast %cst_48 : f32 to vector<8x64xf32>
    %123 = arith.mulf %122, %112 : vector<8x64xf32>
    %124 = arith.mulf %123, %112 : vector<8x64xf32>
    %cst_49 = arith.constant 5.000000e-01 : f32
    %125 = vector.broadcast %cst_49 : f32 to vector<8x64xf32>
    %126 = arith.mulf %125, %113 : vector<8x64xf32>
    %127 = arith.subf %124, %126 : vector<8x64xf32>
    %128 = arith.truncf %127 : vector<8x64xf32> to vector<8x64xbf16>
    %c192 = arith.constant 192 : index
    %c0_50 = arith.constant 0 : index
    %129 = vector.load %arg4[%c192, %c0_50] : memref<320x16xbf16, #tpu.memory_space<vmem>>, vector<64x16xbf16>
    %cst_51 = arith.constant dense<0.000000e+00> : vector<8x16xf32>
    %130 = tpu.matmul %128, %129, %cst_51 {dimension_numbers = #tpu.dot_dimension_numbers<[1], [0], [0], [1], [0, 0, 1, 1], [], []>} : vector<8x64xbf16>, vector<64x16xbf16>, vector<8x16xf32> -> vector<8x16xf32>
    %131 = arith.addf %121, %130 : vector<8x16xf32>
    %cst_52 = arith.constant 1.66666663 : f32
    %132 = vector.broadcast %cst_52 : f32 to vector<8x64xf32>
    %133 = arith.mulf %132, %112 : vector<8x64xf32>
    %134 = arith.mulf %133, %127 : vector<8x64xf32>
    %cst_53 = arith.constant 0.666666686 : f32
    %135 = vector.broadcast %cst_53 : f32 to vector<8x64xf32>
    %136 = arith.mulf %135, %112 : vector<8x64xf32>
    %137 = arith.subf %134, %136 : vector<8x64xf32>
    %138 = arith.truncf %137 : vector<8x64xf32> to vector<8x64xbf16>
    %c256 = arith.constant 256 : index
    %c0_54 = arith.constant 0 : index
    %139 = vector.load %arg4[%c256, %c0_54] : memref<320x16xbf16, #tpu.memory_space<vmem>>, vector<64x16xbf16>
    %cst_55 = arith.constant dense<0.000000e+00> : vector<8x16xf32>
    %140 = tpu.matmul %138, %139, %cst_55 {dimension_numbers = #tpu.dot_dimension_numbers<[1], [0], [0], [1], [0, 0, 1, 1], [], []>} : vector<8x64xbf16>, vector<64x16xbf16>, vector<8x16xf32> -> vector<8x16xf32>
    %141 = arith.addf %131, %140 : vector<8x16xf32>
    %cst_56 = arith.constant dense<0.000000e+00> : vector<8xf32>
    %142 = vector.multi_reduction <add>, %141, %cst_56 [1] : vector<8x16xf32> to vector<8xf32>
    %143 = vector.shape_cast %142 : vector<8xf32> to vector<8x1xf32>
    %cst_57 = arith.constant 6.250000e-02 : f32
    %144 = vector.broadcast %cst_57 : f32 to vector<8x1xf32>
    %145 = arith.mulf %143, %144 : vector<8x1xf32>
    %146 = arith.mulf %141, %141 : vector<8x16xf32>
    %cst_58 = arith.constant dense<0.000000e+00> : vector<8xf32>
    %147 = vector.multi_reduction <add>, %146, %cst_58 [1] : vector<8x16xf32> to vector<8xf32>
    %148 = vector.shape_cast %147 : vector<8xf32> to vector<8x1xf32>
    %cst_59 = arith.constant 6.250000e-02 : f32
    %149 = vector.broadcast %cst_59 : f32 to vector<8x1xf32>
    %150 = arith.mulf %148, %149 : vector<8x1xf32>
    %151 = arith.mulf %145, %145 : vector<8x1xf32>
    %152 = arith.subf %150, %151 : vector<8x1xf32>
    %cst_60 = arith.constant 9.99999974E-6 : f32
    %153 = vector.broadcast %cst_60 : f32 to vector<8x1xf32>
    %154 = arith.addf %152, %153 : vector<8x1xf32>
    %155 = math.rsqrt %154 : vector<8x1xf32>
    %c0_61 = arith.constant 0 : index
    %c0_62 = arith.constant 0 : index
    %156 = vector.load %arg5[%c0_61, %c0_62] : memref<1x16xf32, #tpu.memory_space<vmem>>, vector<1x16xf32>
    %157 = vector.broadcast %156 : vector<1x16xf32> to vector<8x16xf32>
    %158 = vector.broadcast %155 : vector<8x1xf32> to vector<8x16xf32>
    %159 = arith.mulf %157, %158 : vector<8x16xf32>
    %c0_63 = arith.constant 0 : index
    %c0_64 = arith.constant 0 : index
    %160 = vector.load %arg6[%c0_63, %c0_64] : memref<1x16xf32, #tpu.memory_space<vmem>>, vector<1x16xf32>
    %161 = vector.broadcast %145 : vector<8x1xf32> to vector<8x16xf32>
    %162 = arith.mulf %161, %159 : vector<8x16xf32>
    %163 = vector.broadcast %160 : vector<1x16xf32> to vector<8x16xf32>
    %164 = arith.subf %163, %162 : vector<8x16xf32>
    %165 = arith.mulf %141, %159 : vector<8x16xf32>
    %166 = arith.addf %165, %164 : vector<8x16xf32>
    %167 = arith.negf %166 : vector<8x16xf32>
    %168 = math.exp %167 : vector<8x16xf32>
    %cst_65 = arith.constant 1.000000e+00 : f32
    %169 = vector.broadcast %cst_65 : f32 to vector<8x16xf32>
    %170 = arith.addf %169, %168 : vector<8x16xf32>
    %171 = arith.divf %169, %170 : vector<8x16xf32>
    %172 = arith.mulf %166, %171 : vector<8x16xf32>
    %c0_66 = arith.constant 0 : index
    %c0_67 = arith.constant 0 : index
    %173 = vector.load %arg7[%c0_66, %c0_67] : memref<8x16xf32, #tpu.memory_space<vmem>>, vector<8x16xf32>
    tpu.vector_store %arg7[%c0_66, %c0_67], %172 {strides = array<i32>} : memref<8x16xf32, #tpu.memory_space<vmem>>, vector<8x16xf32>,
    return
  }
}

</mosaic_0001>

<llo_original>
// kernel: kaln_forward.1
$region0: #{kaln_forward.1}
  #allocation0 [shape = 'u32[]', space=smem, size = 0x4, offset = 0x4, fixed_abs, tag = 'smem constant byte address 0x4 - core index']
  #allocation1 [shape = 'u32[144,128]{1,0:T(1,128)}', space=vmem, size = 0x12000, scoped, tag = 'internal scratch']
  %s0 = inlined_call_operand.vmem [shape: f32[8,32], index: 0, kind: input, shape index: {}]
  %s1 = inlined_call_operand.vmem [shape: bf16[160,64], index: 1, kind: input, shape index: {}]
  %s2 = inlined_call_operand.vmem [shape: f32[1,64], index: 2, kind: input, shape index: {}]
  %s3 = inlined_call_operand.vmem [shape: f32[1,64], index: 3, kind: input, shape index: {}]
  %s4 = inlined_call_operand.vmem [shape: bf16[320,16], index: 4, kind: input, shape index: {}]
  %s5 = inlined_call_operand.vmem [shape: f32[1,16], index: 5, kind: input, shape index: {}]
  %s6 = inlined_call_operand.vmem [shape: f32[1,16], index: 6, kind: input, shape index: {}]
  %s7 = inlined_call_operand.hbm [shape: f32[8,16], index: 7, kind: output, shape index: {}]
  %s8 = sld [smem:[#allocation0]]
  $region38: #{kaln_forward.1} parent=0
    _
  %s10 = ssub.s32 1, %s8
  %s11 = scalar_select 0, %s10, %s8
  $region1: #{kaln_forward.1} parent=0
    #allocation2 [shape = 'u8[4096]{0}', space=vmem, size = 0x1000, scoped, tag = 'output window, operand 0, single buffered']
    #allocation3 [shape = 's32[1]{0}', space=sflag, size = 0x4, scoped, tag = 'scoped memory for kaln_forward.1']
    %12 = vsyncpa [#allocation3], 0
    // Predicated region
    $region2: #{kaln_forward.1} parent=1 // pred_check
      _
    $region3: #{kaln_forward.1} parent=1 // pred_check_branch
      %14 = sbr.rel (0) target = $region5
    $region4: #{kaln_forward.1} parent=1 // pred_region
      _
    $region5: #{kaln_forward.1} parent=1 // pred_fallthru
      _
    // Predicated region
    $region6: #{kaln_forward.1} parent=1 // pred_check
      _
    $region7: #{kaln_forward.1} parent=1 // pred_check_branch
      %16 = sbr.rel (0) target = $region9
    $region8: #{kaln_forward.1} parent=1 // pred_region
      _
    $region9: #{kaln_forward.1} parent=1 // pred_fallthru
      _
    // Predicated region
    $region10: #{kaln_forward.1} parent=1 // pred_check
      _
    $region11: #{kaln_forward.1} parent=1 // pred_check_branch
      %18 = sbr.rel (0) target = $region13
    $region12: #{kaln_forward.1} parent=1 // pred_region
      _
    $region13: #{kaln_forward.1} parent=1 // pred_fallthru
      _
    // Predicated region
    $region14: #{kaln_forward.1} parent=1 // pred_check
      _
    $region15: #{kaln_forward.1} parent=1 // pred_check_branch
      %20 = sbr.rel (0) target = $region17
    $region16: #{kaln_forward.1} parent=1 // pred_region
      _
    $region17: #{kaln_forward.1} parent=1 // pred_fallthru
      _
    // Predicated region
    $region18: #{kaln_forward.1} parent=1 // pred_check
      _
    $region19: #{kaln_forward.1} parent=1 // pred_check_branch
      %22 = sbr.rel (0) target = $region21
    $region20: #{kaln_forward.1} parent=1 // pred_region
      _
    $region21: #{kaln_forward.1} parent=1 // pred_fallthru
      _
    // Predicated region
    $region22: #{kaln_forward.1} parent=1 // pred_check
      _
    $region23: #{kaln_forward.1} parent=1 // pred_check_branch
      %24 = sbr.rel (0) target = $region25
    $region24: #{kaln_forward.1} parent=1 // pred_region
      _
    $region25: #{kaln_forward.1} parent=1 // pred_fallthru
      _
    // Predicated region
    $region26: #{kaln_forward.1} parent=1 // pred_check
      _
    $region27: #{kaln_forward.1} parent=1 // pred_check_branch
      %26 = sbr.rel (0) target = $region29
    $region28: #{kaln_forward.1} parent=1 // pred_region
      _
    $region29: #{kaln_forward.1} parent=1 // pred_fallthru
      _
    %v29 = vld [vmem:[%s0] sm:$0xff]
    %v30 = vxor.u32 %v29, 2147483648
    %v31 = vmul.f32 %v30, 1.442695
    %v32 = vpow.pop %v31
    %v33 = vadd.f32 %v32, 1.0
    %v34 = vrcp.pop %v33
    %v35 = vmul.f32 1.0, %v34
    %v36 = vmul.f32 %v29, %v35
    %v37 = vpack.c.bf16 %v36, %v36
    %v38 = vld [vmem:[%s1] sm:$0xf]
    %v39 = vld [vmem:[%s1 + $0x4] sm:$0xf]
    %v40 = vld [vmem:[%s1 + $0x8] sm:$0xf]
    %v41 = vld [vmem:[%s1 + $0xc] sm:$0xf]
    %vm42 = vcmask 261120
    %v43 = vsel %vm42, %v29, inf
    %44 = vmin.xlane.f32.xlu0 %v43
    %v45 = vpop.xlane.xlu0 %44
    %v46 = vrot.slane %v45, 4
    %v47 = vmin.f32 %v45, %v46
    %v48 = vrot.slane %v47, 2
    %v49 = vmin.f32 %v47, %v48
    %v50 = vrot.slane %v49, 1
    %v51 = vmin.f32 %v49, %v50
    %s52 = vtos %v51
    %v53 = vsel %vm42, %v29, -inf
    %54 = vmax.xlane.f32.xlu0 %v53
    %v55 = vpop.xlane.xlu0 %54
    %v56 = vrot.slane %v55, 4
    %v57 = vmax.f32 %v55, %v56
    %v58 = vrot.slane %v57, 2
    %v59 = vmax.f32 %v57, %v58
    %v60 = vrot.slane %v59, 1
    %v61 = vmax.f32 %v59, %v60
    %s62 = vtos %v61
    %s63 = ssub.f32 %s62, %s52
    %v64 = vstv %s63
    %v65 = vrcp.pop %v64
    %s66 = vtos %v65
    %s67 = smul.f32 2.0, %s66
    %s68 = ssub.f32 0.0, %s52
    %s69 = smul.f32 %s68, %s67
    %s70 = ssub.f32 %s69, 1.0
    %v71 = vstv %s67
    %v72 = vmul.f32 %v29, %v71
    %v73 = vstv %s70
    %v74 = vadd.f32 %v72, %v73
    %v75 = vld [vmem:[%s1 + $0x10] sm:$0xf]
    %v76 = vld [vmem:[%s1 + $0x14] sm:$0xf]
    %v77 = vld [vmem:[%s1 + $0x18] sm:$0xf]
    %v78 = vld [vmem:[%s1 + $0x1c] sm:$0xf]
    %v83 = vunpack.c.l.b16 %v75
    %v84 = vunpack.c.l.b16 %v76
    %v85 = vunpack.c.l.b16 %v77
    %v86 = vunpack.c.l.b16 %v78
    %v87 = vpack.c.b16 %v84, %v83
    %v88 = vpack.c.b16 %v86, %v85
    %v92 = vsel %vm42, 1065369472, 0
    %94 = vmatprep.subr.bf16.mxu0 0
    %95 = vmatpush1.bf16.msra.mxu0 %v87
    %96 = vmatprep.subr.bf16.mxu0 0
    %97 = vmatpush1.bf16.msra.mxu0 %v88
    %98 = vmatprep.subr.bf16.mxu0 0
    %99 = vmatpush1.bf16.msra.mxu0 0
    %100 = vmatprep.subr.bf16.mxu0 0
    %101 = vmatpush1.bf16.msra.mxu0 0
    %102 = vmatprep.subr.bf16.mxu0 0
    %103 = vmatpush1.bf16.msra.mxu0 0
    %104 = vmatprep.subr.bf16.mxu0 0
    %105 = vmatpush1.bf16.msra.mxu0 0
    %106 = vmatprep.subr.bf16.mxu0 0
    %107 = vmatpush1.bf16.msra.mxu0 0
    %108 = vmatprep.subr.bf16.mxu0 0
    %109 = vmatpush1.bf16.msra.mxu0 0
    %110 = vmatprep.subr.bf16.mxu0 0
    %111 = vmatpush1.bf16.msra.mxu0 0
    %112 = vmatprep.subr.bf16.mxu0 0
    %113 = vmatpush1.bf16.msra.mxu0 0
    %114 = vmatprep.subr.bf16.mxu0 0
    %115 = vmatpush1.bf16.msra.mxu0 0
    %116 = vmatprep.subr.bf16.mxu0 0
    %117 = vmatpush1.bf16.msra.mxu0 0
    %118 = vmatprep.subr.bf16.mxu0 0
    %119 = vmatpush1.bf16.msra.mxu0 0
    %120 = vmatprep.subr.bf16.mxu0 0
    %121 = vmatpush1.bf16.msra.mxu0 0
    %122 = vmatprep.subr.bf16.mxu0 0
    %123 = vmatpush1.bf16.msra.mxu0 0
    %124 = vmatprep.subr.bf16.mxu0 0
    %125 = vmatpush1.bf16.msra.mxu0 0
    %126 = vmatprep.mubr.bf16.mxu0 0
    %127 = vmatmul.mubr.bf16.gmra.mrb[0].mxu0 %v92
    %v128 = vpop.f32.mrb[0].mxu0
    %v129 = vadd.f32 0.0, %v128
    %v130 = vpop.f32.mrb[0].mxu0
    %v131 = vpop.f32.mrb[0].mxu0
    %v132 = vpop.f32.mrb[0].mxu0
    %133 = vdwg.mxu0
    %v138 = vunpack.c.l.b16 %v38
    %v139 = vunpack.c.l.b16 %v39
    %v140 = vunpack.c.l.b16 %v40
    %v141 = vunpack.c.l.b16 %v41
    %v142 = vpack.c.b16 %v139, %v138
    %v143 = vpack.c.b16 %v141, %v140
    %v147 = vsel %vm42, %v37, 0
    %149 = vmatprep.subr.bf16.mxu0 0
    %150 = vmatpush1.bf16.msra.mxu0 %v142
    %151 = vmatprep.subr.bf16.mxu0 0
    %152 = vmatpush1.bf16.msra.mxu0 %v143
    %153 = vmatprep.subr.bf16.mxu0 0
    %154 = vmatpush1.bf16.msra.mxu0 0
    %155 = vmatprep.subr.bf16.mxu0 0
    %156 = vmatpush1.bf16.msra.mxu0 0
    %157 = vmatprep.subr.bf16.mxu0 0
    %158 = vmatpush1.bf16.msra.mxu0 0
    %159 = vmatprep.subr.bf16.mxu0 0
    %160 = vmatpush1.bf16.msra.mxu0 0
    %161 = vmatprep.subr.bf16.mxu0 0
    %162 = vmatpush1.bf16.msra.mxu0 0
    %163 = vmatprep.subr.bf16.mxu0 0
    %164 = vmatpush1.bf16.msra.mxu0 0
    %165 = vmatprep.subr.bf16.mxu0 0
    %166 = vmatpush1.bf16.msra.mxu0 0
    %167 = vmatprep.subr.bf16.mxu0 0
    %168 = vmatpush1.bf16.msra.mxu0 0
    %169 = vmatprep.subr.bf16.mxu0 0
    %170 = vmatpush1.bf16.msra.mxu0 0
    %171 = vmatprep.subr.bf16.mxu0 0
    %172 = vmatpush1.bf16.msra.mxu0 0
    %173 = vmatprep.subr.bf16.mxu0 0
    %174 = vmatpush1.bf16.msra.mxu0 0
    %175 = vmatprep.subr.bf16.mxu0 0
    %176 = vmatpush1.bf16.msra.mxu0 0
    %177 = vmatprep.subr.bf16.mxu0 0
    %178 = vmatpush1.bf16.msra.mxu0 0
    %179 = vmatprep.subr.bf16.mxu0 0
    %180 = vmatpush1.bf16.msra.mxu0 0
    %181 = vmatprep.mubr.bf16.mxu0 0
    %182 = vmatmul.mubr.bf16.gmra.mrb[0].mxu0 %v147
    %v183 = vpop.f32.mrb[0].mxu0
    %v184 = vadd.f32 %v129, %v183
    %v185 = vpop.f32.mrb[0].mxu0
    %v186 = vpop.f32.mrb[0].mxu0
    %v187 = vpop.f32.mrb[0].mxu0
    %188 = vdwg.mxu0
    %v189 = vpack.c.bf16 %v74, %v74
    %v190 = vld [vmem:[%s1 + $0x20] sm:$0xf]
    %v191 = vld [vmem:[%s1 + $0x24] sm:$0xf]
    %v192 = vld [vmem:[%s1 + $0x28] sm:$0xf]
    %v193 = vld [vmem:[%s1 + $0x2c] sm:$0xf]
    %v198 = vunpack.c.l.b16 %v190
    %v199 = vunpack.c.l.b16 %v191
    %v200 = vunpack.c.l.b16 %v192
    %v201 = vunpack.c.l.b16 %v193
    %v202 = vpack.c.b16 %v199, %v198
    %v203 = vpack.c.b16 %v201, %v200
    %v207 = vsel %vm42, %v189, 0
    %209 = vmatprep.subr.bf16.mxu0 0
    %210 = vmatpush1.bf16.msra.mxu0 %v202
    %211 = vmatprep.subr.bf16.mxu0 0
    %212 = vmatpush1.bf16.msra.mxu0 %v203
    %213 = vmatprep.subr.bf16.mxu0 0
    %214 = vmatpush1.bf16.msra.mxu0 0
    %215 = vmatprep.subr.bf16.mxu0 0
    %216 = vmatpush1.bf16.msra.mxu0 0
    %217 = vmatprep.subr.bf16.mxu0 0
    %218 = vmatpush1.bf16.msra.mxu0 0
    %219 = vmatprep.subr.bf16.mxu0 0
    %220 = vmatpush1.bf16.msra.mxu0 0
    %221 = vmatprep.subr.bf16.mxu0 0
    %222 = vmatpush1.bf16.msra.mxu0 0
    %223 = vmatprep.subr.bf16.mxu0 0
    %224 = vmatpush1.bf16.msra.mxu0 0
    %225 = vmatprep.subr.bf16.mxu0 0
    %226 = vmatpush1.bf16.msra.mxu0 0
    %227 = vmatprep.subr.bf16.mxu0 0
    %228 = vmatpush1.bf16.msra.mxu0 0
    %229 = vmatprep.subr.bf16.mxu0 0
    %230 = vmatpush1.bf16.msra.mxu0 0
    %231 = vmatprep.subr.bf16.mxu0 0
    %232 = vmatpush1.bf16.msra.mxu0 0
    %233 = vmatprep.subr.bf16.mxu0 0
    %234 = vmatpush1.bf16.msra.mxu0 0
    %235 = vmatprep.subr.bf16.mxu0 0
    %236 = vmatpush1.bf16.msra.mxu0 0
    %237 = vmatprep.subr.bf16.mxu0 0
    %238 = vmatpush1.bf16.msra.mxu0 0
    %239 = vmatprep.subr.bf16.mxu0 0
    %240 = vmatpush1.bf16.msra.mxu0 0
    %241 = vmatprep.mubr.bf16.mxu0 0
    %242 = vmatmul.mubr.bf16.gmra.mrb[0].mxu0 %v207
    %v243 = vpop.f32.mrb[0].mxu0
    %v244 = vadd.f32 0.0, %v243
    %v245 = vpop.f32.mrb[0].mxu0
    %v246 = vpop.f32.mrb[0].mxu0
    %v247 = vpop.f32.mrb[0].mxu0
    %248 = vdwg.mxu0
    %v249 = vadd.f32 %v184, %v244
    %v250 = vmul.f32 %v74, 1.5
    %v251 = vmul.f32 %v250, %v74
    %v252 = vsub.f32 %v251, 0.5
    %v253 = vpack.c.bf16 %v252, %v252
    %v254 = vld [vmem:[%s1 + $0x30] sm:$0xf]
    %v255 = vld [vmem:[%s1 + $0x34] sm:$0xf]
    %v256 = vld [vmem:[%s1 + $0x38] sm:$0xf]
    %v257 = vld [vmem:[%s1 + $0x3c] sm:$0xf]
    %v262 = vunpack.c.l.b16 %v254
    %v263 = vunpack.c.l.b16 %v255
    %v264 = vunpack.c.l.b16 %v256
    %v265 = vunpack.c.l.b16 %v257
    %v266 = vpack.c.b16 %v263, %v262
    %v267 = vpack.c.b16 %v265, %v264
    %v271 = vsel %vm42, %v253, 0
    %273 = vmatprep.subr.bf16.mxu0 0
    %274 = vmatpush1.bf16.msra.mxu0 %v266
    %275 = vmatprep.subr.bf16.mxu0 0
    %276 = vmatpush1.bf16.msra.mxu0 %v267
    %277 = vmatprep.subr.bf16.mxu0 0
    %278 = vmatpush1.bf16.msra.mxu0 0
    %279 = vmatprep.subr.bf16.mxu0 0
    %280 = vmatpush1.bf16.msra.mxu0 0
    %281 = vmatprep.subr.bf16.mxu0 0
    %282 = vmatpush1.bf16.msra.mxu0 0
    %283 = vmatprep.subr.bf16.mxu0 0
    %284 = vmatpush1.bf16.msra.mxu0 0
    %285 = vmatprep.subr.bf16.mxu0 0
    %286 = vmatpush1.bf16.msra.mxu0 0
    %287 = vmatprep.subr.bf16.mxu0 0
    %288 = vmatpush1.bf16.msra.mxu0 0
    %289 = vmatprep.subr.bf16.mxu0 0
    %290 = vmatpush1.bf16.msra.mxu0 0
    %291 = vmatprep.subr.bf16.mxu0 0
    %292 = vmatpush1.bf16.msra.mxu0 0
    %293 = vmatprep.subr.bf16.mxu0 0
    %294 = vmatpush1.bf16.msra.mxu0 0
    %295 = vmatprep.subr.bf16.mxu0 0
    %296 = vmatpush1.bf16.msra.mxu0 0
    %297 = vmatprep.subr.bf16.mxu0 0
    %298 = vmatpush1.bf16.msra.mxu0 0
    %299 = vmatprep.subr.bf16.mxu0 0
    %300 = vmatpush1.bf16.msra.mxu0 0
    %301 = vmatprep.subr.bf16.mxu0 0
    %302 = vmatpush1.bf16.msra.mxu0 0
    %303 = vmatprep.subr.bf16.mxu0 0
    %304 = vmatpush1.bf16.msra.mxu0 0
    %305 = vmatprep.mubr.bf16.mxu0 0
    %306 = vmatmul.mubr.bf16.gmra.mrb[0].mxu0 %v271
    %v307 = vpop.f32.mrb[0].mxu0
    %v308 = vadd.f32 0.0, %v307
    %v309 = vpop.f32.mrb[0].mxu0
    %v310 = vpop.f32.mrb[0].mxu0
    %v311 = vpop.f32.mrb[0].mxu0
    %312 = vdwg.mxu0
    %v313 = vadd.f32 %v249, %v308
    %v314 = vmul.f32 %v74, 1.6666666
    %v315 = vmul.f32 %v314, %v252
    %v316 = vmul.f32 %v74, 0.6666667
    %v317 = vsub.f32 %v315, %v316
    %v318 = vpack.c.bf16 %v317, %v317
    %v319 = vld [vmem:[%s1 + $0x40] sm:$0xf]
    %v320 = vld [vmem:[%s1 + $0x44] sm:$0xf]
    %v321 = vld [vmem:[%s1 + $0x48] sm:$0xf]
    %v322 = vld [vmem:[%s1 + $0x4c] sm:$0xf]
    %v327 = vunpack.c.l.b16 %v319
    %v328 = vunpack.c.l.b16 %v320
    %v329 = vunpack.c.l.b16 %v321
    %v330 = vunpack.c.l.b16 %v322
    %v331 = vpack.c.b16 %v328, %v327
    %v332 = vpack.c.b16 %v330, %v329
    %v336 = vsel %vm42, %v318, 0
    %338 = vmatprep.subr.bf16.mxu0 0
    %339 = vmatpush1.bf16.msra.mxu0 %v331
    %340 = vmatprep.subr.bf16.mxu0 0
    %341 = vmatpush1.bf16.msra.mxu0 %v332
    %342 = vmatprep.subr.bf16.mxu0 0
    %343 = vmatpush1.bf16.msra.mxu0 0
    %344 = vmatprep.subr.bf16.mxu0 0
    %345 = vmatpush1.bf16.msra.mxu0 0
    %346 = vmatprep.subr.bf16.mxu0 0
    %347 = vmatpush1.bf16.msra.mxu0 0
    %348 = vmatprep.subr.bf16.mxu0 0
    %349 = vmatpush1.bf16.msra.mxu0 0
    %350 = vmatprep.subr.bf16.mxu0 0
    %351 = vmatpush1.bf16.msra.mxu0 0
    %352 = vmatprep.subr.bf16.mxu0 0
    %353 = vmatpush1.bf16.msra.mxu0 0
    %354 = vmatprep.subr.bf16.mxu0 0
    %355 = vmatpush1.bf16.msra.mxu0 0
    %356 = vmatprep.subr.bf16.mxu0 0
    %357 = vmatpush1.bf16.msra.mxu0 0
    %358 = vmatprep.subr.bf16.mxu0 0
    %359 = vmatpush1.bf16.msra.mxu0 0
    %360 = vmatprep.subr.bf16.mxu0 0
    %361 = vmatpush1.bf16.msra.mxu0 0
    %362 = vmatprep.subr.bf16.mxu0 0
    %363 = vmatpush1.bf16.msra.mxu0 0
    %364 = vmatprep.subr.bf16.mxu0 0
    %365 = vmatpush1.bf16.msra.mxu0 0
    %366 = vmatprep.subr.bf16.mxu0 0
    %367 = vmatpush1.bf16.msra.mxu0 0
    %368 = vmatprep.subr.bf16.mxu0 0
    %369 = vmatpush1.bf16.msra.mxu0 0
    %370 = vmatprep.mubr.bf16.mxu0 0
    %371 = vmatmul.mubr.bf16.gmra.mrb[0].mxu0 %v336
    %v372 = vpop.f32.mrb[0].mxu0
    %v373 = vadd.f32 0.0, %v372
    %v374 = vpop.f32.mrb[0].mxu0
    %v375 = vpop.f32.mrb[0].mxu0
    %v376 = vpop.f32.mrb[0].mxu0
    %377 = vdwg.mxu0
    %v378 = vadd.f32 %v313, %v373
    %vm379 = vcmask 523264
    %v380 = vsel %vm379, %v378, 0.0
    %381 = vadd.xlane.f32.xlu0 %v380
    %v382 = vpop.xlane.xlu0 %381
    %v383 = vmul.f32 %v382, 0.015625
    %v384 = vmul.f32 %v378, %v378
    %v385 = vsel %vm379, %v384, 0.0
    %386 = vadd.xlane.f32.xlu0 %v385
    %v387 = vpop.xlane.xlu0 %386
    %v388 = vmul.f32 %v387, 0.015625
    %v389 = vmul.f32 %v383, %v383
    %v390 = vsub.f32 %v388, %v389
    %v391 = vadd.f32 %v390, 1e-05
    %v392 = vrsqrt.pop %v391
    %v393 = vld [vmem:[%s2] sm:$0x1]
    %v395 = vlaneseq
    %v396 = vshrl.u32 %v395, 7
    %v397 = vsub.s32 0, %v396
    %v398 = vrot.slane %v393, %v397
    %v400 = vmul.f32 %v398, %v392
    %v401 = vld [vmem:[%s3] sm:$0x1]
    %v402 = vmul.f32 %v383, %v400
    %v404 = vlaneseq
    %v405 = vshrl.u32 %v404, 7
    %v406 = vsub.s32 0, %v405
    %v407 = vrot.slane %v401, %v406
    %v409 = vsub.f32 %v407, %v402
    %v410 = vmul.f32 %v378, %v400
    %v411 = vadd.f32 %v410, %v409
    %v412 = vxor.u32 %v411, 2147483648
    %v413 = vmul.f32 %v412, 1.442695
    %v414 = vpow.pop %v413
    %v415 = vadd.f32 %v414, 1.0
    %v416 = vrcp.pop %v415
    %v417 = vmul.f32 1.0, %v416
    %v418 = vmul.f32 %v411, %v417
    %v419 = vxor.u32 %v418, 2147483648
    %v420 = vmul.f32 %v419, 1.442695
    %v421 = vpow.pop %v420
    %v422 = vadd.f32 %v421, 1.0
    %v423 = vrcp.pop %v422
    %v424 = vmul.f32 1.0, %v423
    %v425 = vmul.f32 %v418, %v424
    %v426 = vpack.c.bf16 %v425, %v425
    %v427 = vld [vmem:[%s4] sm:$0xf]
    %v428 = vld [vmem:[%s4 + $0x4] sm:$0xf]
    %v429 = vld [vmem:[%s4 + $0x8] sm:$0xf]
    %v430 = vld [vmem:[%s4 + $0xc] sm:$0xf]
    %v431 = vld [vmem:[%s4 + $0x10] sm:$0xf]
    %v432 = vld [vmem:[%s4 + $0x14] sm:$0xf]
    %v433 = vld [vmem:[%s4 + $0x18] sm:$0xf]
    %v434 = vld [vmem:[%s4 + $0x1c] sm:$0xf]
    %v435 = vsel %vm379, %v418, inf
    %436 = vmin.xlane.f32.xlu0 %v435
    %v437 = vpop.xlane.xlu0 %436
    %v438 = vrot.slane %v437, 4
    %v439 = vmin.f32 %v437, %v438
    %v440 = vrot.slane %v439, 2
    %v441 = vmin.f32 %v439, %v440
    %v442 = vrot.slane %v441, 1
    %v443 = vmin.f32 %v441, %v442
    %s444 = vtos %v443
    %v445 = vsel %vm379, %v418, -inf
    %446 = vmax.xlane.f32.xlu0 %v445
    %v447 = vpop.xlane.xlu0 %446
    %v448 = vrot.slane %v447, 4
    %v449 = vmax.f32 %v447, %v448
    %v450 = vrot.slane %v449, 2
    %v451 = vmax.f32 %v449, %v450
    %v452 = vrot.slane %v451, 1
    %v453 = vmax.f32 %v451, %v452
    %s454 = vtos %v453
    %s455 = ssub.f32 %s454, %s444
    %v456 = vstv %s455
    %v457 = vrcp.pop %v456
    %s458 = vtos %v457
    %s459 = smul.f32 2.0, %s458
    %s460 = ssub.f32 0.0, %s444
    %s461 = smul.f32 %s460, %s459
    %s462 = ssub.f32 %s461, 1.0
    %v463 = vstv %s459
    %v464 = vmul.f32 %v418, %v463
    %v465 = vstv %s462
    %v466 = vadd.f32 %v464, %v465
    %v467 = vld [vmem:[%s4 + $0x20] sm:$0xf]
    %v468 = vld [vmem:[%s4 + $0x24] sm:$0xf]
    %v469 = vld [vmem:[%s4 + $0x28] sm:$0xf]
    %v470 = vld [vmem:[%s4 + $0x2c] sm:$0xf]
    %v471 = vld [vmem:[%s4 + $0x30] sm:$0xf]
    %v472 = vld [vmem:[%s4 + $0x34] sm:$0xf]
    %v473 = vld [vmem:[%s4 + $0x38] sm:$0xf]
    %v474 = vld [vmem:[%s4 + $0x3c] sm:$0xf]
    %v483 = vunpack.c.l.b16 %v467
    %v484 = vunpack.c.l.b16 %v468
    %v485 = vunpack.c.l.b16 %v469
    %v486 = vunpack.c.l.b16 %v470
    %v487 = vunpack.c.l.b16 %v471
    %v488 = vunpack.c.l.b16 %v472
    %v489 = vunpack.c.l.b16 %v473
    %v490 = vunpack.c.l.b16 %v474
    %v491 = vpack.c.b16 %v484, %v483
    %v492 = vpack.c.b16 %v486, %v485
    %v493 = vpack.c.b16 %v488, %v487
    %v494 = vpack.c.b16 %v490, %v489
    %v499 = vsel %vm379, 1065369472, 0
    %501 = vmatprep.subr.bf16.mxu0 0
    %502 = vmatpush1.bf16.msra.mxu0 %v491
    %503 = vmatprep.subr.bf16.mxu0 0
    %504 = vmatpush1.bf16.msra.mxu0 %v492
    %505 = vmatprep.subr.bf16.mxu0 0
    %506 = vmatpush1.bf16.msra.mxu0 %v493
    %507 = vmatprep.subr.bf16.mxu0 0
    %508 = vmatpush1.bf16.msra.mxu0 %v494
    %509 = vmatprep.subr.bf16.mxu0 0
    %510 = vmatpush1.bf16.msra.mxu0 0
    %511 = vmatprep.subr.bf16.mxu0 0
    %512 = vmatpush1.bf16.msra.mxu0 0
    %513 = vmatprep.subr.bf16.mxu0 0
    %514 = vmatpush1.bf16.msra.mxu0 0
    %515 = vmatprep.subr.bf16.mxu0 0
    %516 = vmatpush1.bf16.msra.mxu0 0
    %517 = vmatprep.subr.bf16.mxu0 0
    %518 = vmatpush1.bf16.msra.mxu0 0
    %519 = vmatprep.subr.bf16.mxu0 0
    %520 = vmatpush1.bf16.msra.mxu0 0
    %521 = vmatprep.subr.bf16.mxu0 0
    %522 = vmatpush1.bf16.msra.mxu0 0
    %523 = vmatprep.subr.bf16.mxu0 0
    %524 = vmatpush1.bf16.msra.mxu0 0
    %525 = vmatprep.subr.bf16.mxu0 0
    %526 = vmatpush1.bf16.msra.mxu0 0
    %527 = vmatprep.subr.bf16.mxu0 0
    %528 = vmatpush1.bf16.msra.mxu0 0
    %529 = vmatprep.subr.bf16.mxu0 0
    %530 = vmatpush1.bf16.msra.mxu0 0
    %531 = vmatprep.subr.bf16.mxu0 0
    %532 = vmatpush1.bf16.msra.mxu0 0
    %533 = vmatprep.mubr.bf16.mxu0 0
    %534 = vmatmul.mubr.bf16.gmra.mrb[0].mxu0 %v499
    %v535 = vpop.f32.mrb[0].mxu0
    %v536 = vadd.f32 0.0, %v535
    %v537 = vpop.f32.mrb[0].mxu0
    %v538 = vpop.f32.mrb[0].mxu0
    %v539 = vpop.f32.mrb[0].mxu0
    %540 = vdwg.mxu0
    %v549 = vunpack.c.l.b16 %v427
    %v550 = vunpack.c.l.b16 %v428
    %v551 = vunpack.c.l.b16 %v429
    %v552 = vunpack.c.l.b16 %v430
    %v553 = vunpack.c.l.b16 %v431
    %v554 = vunpack.c.l.b16 %v432
    %v555 = vunpack.c.l.b16 %v433
    %v556 = vunpack.c.l.b16 %v434
    %v557 = vpack.c.b16 %v550, %v549
    %v558 = vpack.c.b16 %v552, %v551
    %v559 = vpack.c.b16 %v554, %v553
    %v560 = vpack.c.b16 %v556, %v555
    %v566 = vsel %vm379, %v426, 0
    %568 = vmatprep.subr.bf16.mxu0 0
    %569 = vmatpush1.bf16.msra.mxu0 %v557
    %570 = vmatprep.subr.bf16.mxu0 0
    %571 = vmatpush1.bf16.msra.mxu0 %v558
    %572 = vmatprep.subr.bf16.mxu0 0
    %573 = vmatpush1.bf16.msra.mxu0 %v559
    %574 = vmatprep.subr.bf16.mxu0 0
    %575 = vmatpush1.bf16.msra.mxu0 %v560
    %576 = vmatprep.subr.bf16.mxu0 0
    %577 = vmatpush1.bf16.msra.mxu0 0
    %578 = vmatprep.subr.bf16.mxu0 0
    %579 = vmatpush1.bf16.msra.mxu0 0
    %580 = vmatprep.subr.bf16.mxu0 0
    %581 = vmatpush1.bf16.msra.mxu0 0
    %582 = vmatprep.subr.bf16.mxu0 0
    %583 = vmatpush1.bf16.msra.mxu0 0
    %584 = vmatprep.subr.bf16.mxu0 0
    %585 = vmatpush1.bf16.msra.mxu0 0
    %586 = vmatprep.subr.bf16.mxu0 0
    %587 = vmatpush1.bf16.msra.mxu0 0
    %588 = vmatprep.subr.bf16.mxu0 0
    %589 = vmatpush1.bf16.msra.mxu0 0
    %590 = vmatprep.subr.bf16.mxu0 0
    %591 = vmatpush1.bf16.msra.mxu0 0
    %592 = vmatprep.subr.bf16.mxu0 0
    %593 = vmatpush1.bf16.msra.mxu0 0
    %594 = vmatprep.subr.bf16.mxu0 0
    %595 = vmatpush1.bf16.msra.mxu0 0
    %596 = vmatprep.subr.bf16.mxu0 0
    %597 = vmatpush1.bf16.msra.mxu0 0
    %598 = vmatprep.subr.bf16.mxu0 0
    %599 = vmatpush1.bf16.msra.mxu0 0
    %600 = vmatprep.mubr.bf16.mxu0 0
    %601 = vmatmul.mubr.bf16.gmra.mrb[0].mxu0 %v566
    %v602 = vpop.f32.mrb[0].mxu0
    %v603 = vadd.f32 %v536, %v602
    %v604 = vpop.f32.mrb[0].mxu0
    %v605 = vpop.f32.mrb[0].mxu0
    %v606 = vpop.f32.mrb[0].mxu0
    %607 = vdwg.mxu0
    %v608 = vpack.c.bf16 %v466, %v466
    %v609 = vld [vmem:[%s4 + $0x40] sm:$0xf]
    %v610 = vld [vmem:[%s4 + $0x44] sm:$0xf]
    %v611 = vld [vmem:[%s4 + $0x48] sm:$0xf]
    %v612 = vld [vmem:[%s4 + $0x4c] sm:$0xf]
    %v613 = vld [vmem:[%s4 + $0x50] sm:$0xf]
    %v614 = vld [vmem:[%s4 + $0x54] sm:$0xf]
    %v615 = vld [vmem:[%s4 + $0x58] sm:$0xf]
    %v616 = vld [vmem:[%s4 + $0x5c] sm:$0xf]
    %v625 = vunpack.c.l.b16 %v609
    %v626 = vunpack.c.l.b16 %v610
    %v627 = vunpack.c.l.b16 %v611
    %v628 = vunpack.c.l.b16 %v612
    %v629 = vunpack.c.l.b16 %v613
    %v630 = vunpack.c.l.b16 %v614
    %v631 = vunpack.c.l.b16 %v615
    %v632 = vunpack.c.l.b16 %v616
    %v633 = vpack.c.b16 %v626, %v625
    %v634 = vpack.c.b16 %v628, %v627
    %v635 = vpack.c.b16 %v630, %v629
    %v636 = vpack.c.b16 %v632, %v631
    %v642 = vsel %vm379, %v608, 0
    %644 = vmatprep.subr.bf16.mxu0 0
    %645 = vmatpush1.bf16.msra.mxu0 %v633
    %646 = vmatprep.subr.bf16.mxu0 0
    %647 = vmatpush1.bf16.msra.mxu0 %v634
    %648 = vmatprep.subr.bf16.mxu0 0
    %649 = vmatpush1.bf16.msra.mxu0 %v635
    %650 = vmatprep.subr.bf16.mxu0 0
    %651 = vmatpush1.bf16.msra.mxu0 %v636
    %652 = vmatprep.subr.bf16.mxu0 0
    %653 = vmatpush1.bf16.msra.mxu0 0
    %654 = vmatprep.subr.bf16.mxu0 0
    %655 = vmatpush1.bf16.msra.mxu0 0
    %656 = vmatprep.subr.bf16.mxu0 0
    %657 = vmatpush1.bf16.msra.mxu0 0
    %658 = vmatprep.subr.bf16.mxu0 0
    %659 = vmatpush1.bf16.msra.mxu0 0
    %660 = vmatprep.subr.bf16.mxu0 0
    %661 = vmatpush1.bf16.msra.mxu0 0
    %662 = vmatprep.subr.bf16.mxu0 0
    %663 = vmatpush1.bf16.msra.mxu0 0
    %664 = vmatprep.subr.bf16.mxu0 0
    %665 = vmatpush1.bf16.msra.mxu0 0
    %666 = vmatprep.subr.bf16.mxu0 0
    %667 = vmatpush1.bf16.msra.mxu0 0
    %668 = vmatprep.subr.bf16.mxu0 0
    %669 = vmatpush1.bf16.msra.mxu0 0
    %670 = vmatprep.subr.bf16.mxu0 0
    %671 = vmatpush1.bf16.msra.mxu0 0
    %672 = vmatprep.subr.bf16.mxu0 0
    %673 = vmatpush1.bf16.msra.mxu0 0
    %674 = vmatprep.subr.bf16.mxu0 0
    %675 = vmatpush1.bf16.msra.mxu0 0
    %676 = vmatprep.mubr.bf16.mxu0 0
    %677 = vmatmul.mubr.bf16.gmra.mrb[0].mxu0 %v642
    %v678 = vpop.f32.mrb[0].mxu0
    %v679 = vadd.f32 0.0, %v678
    %v680 = vpop.f32.mrb[0].mxu0
    %v681 = vpop.f32.mrb[0].mxu0
    %v682 = vpop.f32.mrb[0].mxu0
    %683 = vdwg.mxu0
    %v684 = vadd.f32 %v603, %v679
    %v685 = vmul.f32 %v466, 1.5
    %v686 = vmul.f32 %v685, %v466
    %v687 = vsub.f32 %v686, 0.5
    %v688 = vpack.c.bf16 %v687, %v687
    %v689 = vld [vmem:[%s4 + $0x60] sm:$0xf]
    %v690 = vld [vmem:[%s4 + $0x64] sm:$0xf]
    %v691 = vld [vmem:[%s4 + $0x68] sm:$0xf]
    %v692 = vld [vmem:[%s4 + $0x6c] sm:$0xf]
    %v693 = vld [vmem:[%s4 + $0x70] sm:$0xf]
    %v694 = vld [vmem:[%s4 + $0x74] sm:$0xf]
    %v695 = vld [vmem:[%s4 + $0x78] sm:$0xf]
    %v696 = vld [vmem:[%s4 + $0x7c] sm:$0xf]
    %v705 = vunpack.c.l.b16 %v689
    %v706 = vunpack.c.l.b16 %v690
    %v707 = vunpack.c.l.b16 %v691
    %v708 = vunpack.c.l.b16 %v692
    %v709 = vunpack.c.l.b16 %v693
    %v710 = vunpack.c.l.b16 %v694
    %v711 = vunpack.c.l.b16 %v695
    %v712 = vunpack.c.l.b16 %v696
    %v713 = vpack.c.b16 %v706, %v705
    %v714 = vpack.c.b16 %v708, %v707
    %v715 = vpack.c.b16 %v710, %v709
    %v716 = vpack.c.b16 %v712, %v711
    %v722 = vsel %vm379, %v688, 0
    %724 = vmatprep.subr.bf16.mxu0 0
    %725 = vmatpush1.bf16.msra.mxu0 %v713
    %726 = vmatprep.subr.bf16.mxu0 0
    %727 = vmatpush1.bf16.msra.mxu0 %v714
    %728 = vmatprep.subr.bf16.mxu0 0
    %729 = vmatpush1.bf16.msra.mxu0 %v715
    %730 = vmatprep.subr.bf16.mxu0 0
    %731 = vmatpush1.bf16.msra.mxu0 %v716
    %732 = vmatprep.subr.bf16.mxu0 0
    %733 = vmatpush1.bf16.msra.mxu0 0
    %734 = vmatprep.subr.bf16.mxu0 0
    %735 = vmatpush1.bf16.msra.mxu0 0
    %736 = vmatprep.subr.bf16.mxu0 0
    %737 = vmatpush1.bf16.msra.mxu0 0
    %738 = vmatprep.subr.bf16.mxu0 0
    %739 = vmatpush1.bf16.msra.mxu0 0
    %740 = vmatprep.subr.bf16.mxu0 0
    %741 = vmatpush1.bf16.msra.mxu0 0
    %742 = vmatprep.subr.bf16.mxu0 0
    %743 = vmatpush1.bf16.msra.mxu0 0
    %744 = vmatprep.subr.bf16.mxu0 0
    %745 = vmatpush1.bf16.msra.mxu0 0
    %746 = vmatprep.subr.bf16.mxu0 0
    %747 = vmatpush1.bf16.msra.mxu0 0
    %748 = vmatprep.subr.bf16.mxu0 0
    %749 = vmatpush1.bf16.msra.mxu0 0
    %750 = vmatprep.subr.bf16.mxu0 0
    %751 = vmatpush1.bf16.msra.mxu0 0
    %752 = vmatprep.subr.bf16.mxu0 0
    %753 = vmatpush1.bf16.msra.mxu0 0
    %754 = vmatprep.subr.bf16.mxu0 0
    %755 = vmatpush1.bf16.msra.mxu0 0
    %756 = vmatprep.mubr.bf16.mxu0 0
    %757 = vmatmul.mubr.bf16.gmra.mrb[0].mxu0 %v722
    %v758 = vpop.f32.mrb[0].mxu0
    %v759 = vadd.f32 0.0, %v758
    %v760 = vpop.f32.mrb[0].mxu0
    %v761 = vpop.f32.mrb[0].mxu0
    %v762 = vpop.f32.mrb[0].mxu0
    %763 = vdwg.mxu0
    %v764 = vadd.f32 %v684, %v759
    %v765 = vmul.f32 %v466, 1.6666666
    %v766 = vmul.f32 %v765, %v687
    %v767 = vmul.f32 %v466, 0.6666667
    %v768 = vsub.f32 %v766, %v767
    %v769 = vpack.c.bf16 %v768, %v768
    %v770 = vld [vmem:[%s4 + $0x80] sm:$0xf]
    %v771 = vld [vmem:[%s4 + $0x84] sm:$0xf]
    %v772 = vld [vmem:[%s4 + $0x88] sm:$0xf]
    %v773 = vld [vmem:[%s4 + $0x8c] sm:$0xf]
    %v774 = vld [vmem:[%s4 + $0x90] sm:$0xf]
    %v775 = vld [vmem:[%s4 + $0x94] sm:$0xf]
    %v776 = vld [vmem:[%s4 + $0x98] sm:$0xf]
    %v777 = vld [vmem:[%s4 + $0x9c] sm:$0xf]
    %v786 = vunpack.c.l.b16 %v770
    %v787 = vunpack.c.l.b16 %v771
    %v788 = vunpack.c.l.b16 %v772
    %v789 = vunpack.c.l.b16 %v773
    %v790 = vunpack.c.l.b16 %v774
    %v791 = vunpack.c.l.b16 %v775
    %v792 = vunpack.c.l.b16 %v776
    %v793 = vunpack.c.l.b16 %v777
    %v794 = vpack.c.b16 %v787, %v786
    %v795 = vpack.c.b16 %v789, %v788
    %v796 = vpack.c.b16 %v791, %v790
    %v797 = vpack.c.b16 %v793, %v792
    %v803 = vsel %vm379, %v769, 0
    %805 = vmatprep.subr.bf16.mxu0 0
    %806 = vmatpush1.bf16.msra.mxu0 %v794
    %807 = vmatprep.subr.bf16.mxu0 0
    %808 = vmatpush1.bf16.msra.mxu0 %v795
    %809 = vmatprep.subr.bf16.mxu0 0
    %810 = vmatpush1.bf16.msra.mxu0 %v796
    %811 = vmatprep.subr.bf16.mxu0 0
    %812 = vmatpush1.bf16.msra.mxu0 %v797
    %813 = vmatprep.subr.bf16.mxu0 0
    %814 = vmatpush1.bf16.msra.mxu0 0
    %815 = vmatprep.subr.bf16.mxu0 0
    %816 = vmatpush1.bf16.msra.mxu0 0
    %817 = vmatprep.subr.bf16.mxu0 0
    %818 = vmatpush1.bf16.msra.mxu0 0
    %819 = vmatprep.subr.bf16.mxu0 0
    %820 = vmatpush1.bf16.msra.mxu0 0
    %821 = vmatprep.subr.bf16.mxu0 0
    %822 = vmatpush1.bf16.msra.mxu0 0
    %823 = vmatprep.subr.bf16.mxu0 0
    %824 = vmatpush1.bf16.msra.mxu0 0
    %825 = vmatprep.subr.bf16.mxu0 0
    %826 = vmatpush1.bf16.msra.mxu0 0
    %827 = vmatprep.subr.bf16.mxu0 0
    %828 = vmatpush1.bf16.msra.mxu0 0
    %829 = vmatprep.subr.bf16.mxu0 0
    %830 = vmatpush1.bf16.msra.mxu0 0
    %831 = vmatprep.subr.bf16.mxu0 0
    %832 = vmatpush1.bf16.msra.mxu0 0
    %833 = vmatprep.subr.bf16.mxu0 0
    %834 = vmatpush1.bf16.msra.mxu0 0
    %835 = vmatprep.subr.bf16.mxu0 0
    %836 = vmatpush1.bf16.msra.mxu0 0
    %837 = vmatprep.mubr.bf16.mxu0 0
    %838 = vmatmul.mubr.bf16.gmra.mrb[0].mxu0 %v803
    %v839 = vpop.f32.mrb[0].mxu0
    %v840 = vadd.f32 0.0, %v839
    %v841 = vpop.f32.mrb[0].mxu0
    %v842 = vpop.f32.mrb[0].mxu0
    %v843 = vpop.f32.mrb[0].mxu0
    %844 = vdwg.mxu0
    %v845 = vadd.f32 %v764, %v840
    %vm846 = vcmask 130048
    %v847 = vsel %vm846, %v845, 0.0
    %848 = vadd.xlane.f32.xlu0 %v847
    %v849 = vpop.xlane.xlu0 %848
    %v850 = vmul.f32 %v849, 0.0625
    %v851 = vmul.f32 %v845, %v845
    %v852 = vsel %vm846, %v851, 0.0
    %853 = vadd.xlane.f32.xlu0 %v852
    %v854 = vpop.xlane.xlu0 %853
    %v855 = vmul.f32 %v854, 0.0625
    %v856 = vmul.f32 %v850, %v850
    %v857 = vsub.f32 %v855, %v856
    %v858 = vadd.f32 %v857, 1e-05
    %v859 = vrsqrt.pop %v858
    %v860 = vld [vmem:[%s5] sm:$0x1]
    %v862 = vlaneseq
    %v863 = vshrl.u32 %v862, 7
    %v864 = vsub.s32 0, %v863
    %v865 = vrot.slane %v860, %v864
    %v867 = vmul.f32 %v865, %v859
    %v868 = vld [vmem:[%s6] sm:$0x1]
    %v869 = vmul.f32 %v850, %v867
    %v871 = vlaneseq
    %v872 = vshrl.u32 %v871, 7
    %v873 = vsub.s32 0, %v872
    %v874 = vrot.slane %v868, %v873
    %v876 = vsub.f32 %v874, %v869
    %v877 = vmul.f32 %v845, %v867
    %v878 = vadd.f32 %v877, %v876
    %v879 = vxor.u32 %v878, 2147483648
    %v880 = vmul.f32 %v879, 1.442695
    %v881 = vpow.pop %v880
    %v882 = vadd.f32 %v881, 1.0
    %v883 = vrcp.pop %v882
    %v884 = vmul.f32 1.0, %v883
    %v885 = vmul.f32 %v878, %v884
    %886 = vst.msk [vmem:[#allocation2] sm:$0xff] %vm846, %v885
    // Predicated region
    $region30: #{kaln_forward.1} parent=1 // pred_check
      _
    $region31: #{kaln_forward.1} parent=1 // pred_check_branch
      %888 = sbr.rel (0) target = $region33
    $region32: #{kaln_forward.1} parent=1 // pred_region
      %s890 = ssub.s32 128, 128
      %891 = vsyncadd [#allocation3], %s890
      %s893 = sshll.u32 [#allocation2], 4
      %s894 = int_to_ptr.vmem [resolvable:$true] %s893
      %896 = dma.vmem_to_hbm [thread:$0]  %s894, 128, %s7, [#allocation3]
    $region33: #{kaln_forward.1} parent=1 // pred_fallthru
      _
    // Predicated region
    $region34: #{kaln_forward.1} parent=1 // pred_check
      _
    $region35: #{kaln_forward.1} parent=1 // pred_check_branch
      %898 = sbr.rel (0) target = $region37
    $region36: #{kaln_forward.1} parent=1 // pred_region
      %899 = dma.done [#allocation3], 128
    $region37: #{kaln_forward.1} parent=1 // pred_fallthru
      _
    %900 = vsyncpa [#allocation3], 1

</llo_original>
